<compile_context>
chip_gen: v6e
topology: v6e:2x2x1
jax: 0.10.0
libtpu: 0.0.40
codegen_flags: <defaults>
</compile_context>

<pallas_src>
import jax
import jax.numpy as jnp
from jax.experimental import pallas as pl
from jax.experimental.pallas import tpu as pltpu

GAMMA = 1.5
ALPHA = 0.25

_LANES = 128
_SUBLANE_GRAN = 32          # multiple of f32(8)/bf16(16)/int8-fp8(32) sublane packing


def _round_up(x, m):
    return ((x + m - 1) // m) * m


def _focal_elementwise(x_raw, z_raw, gamma, alpha):
    """Per-element focal-modulated BCE-with-logits, computed in f32."""
    x = x_raw.astype(jnp.float32)
    z = z_raw.astype(jnp.float32)

    e = jnp.exp(-jnp.abs(x))                       # shared by BCE and sigmoid
    bce = jnp.maximum(x, 0.0) - x * z + jnp.log1p(e)

    d = 1.0 + e
    inv = pl.reciprocal(d, approx=True)            # single EUP vrcp push
    inv = inv * (2.0 - d * inv)                    # one Newton step -> ~f32 accuracy
    p = jnp.where(x >= 0.0, inv, e * inv)          # sigmoid(x)

    p_t = z * p + (1.0 - z) * (1.0 - p)
    alpha_factor = z * alpha + (1.0 - z) * (1.0 - alpha)
    t = 1.0 - p_t
    if gamma == 1.5:
        modulating_factor = t * jnp.sqrt(t)        # t**1.5 without log/exp
    elif gamma == 2.0:
        modulating_factor = t * t
    elif gamma == 1.0:
        modulating_factor = t
    else:
        modulating_factor = jnp.power(t, gamma)

    return bce * alpha_factor * modulating_factor


def _block_partial_sum(fl, tile_m):
    """(tile_m,128) -> (8,128) partial sum via 4 independent accumulation chains."""
    g = fl.reshape(4, tile_m // 32, 8, _LANES).sum(axis=1)
    return (g[0] + g[1]) + (g[2] + g[3])


def _apply_tail_mask(fl, tile_m, n_valid, need_mask):
    """Zero contributions from padded elements (flat index >= n_valid)."""
    if not need_mask:
        return fl
    base = pl.program_id(0) * (tile_m * _LANES)
    row = jax.lax.broadcasted_iota(jnp.int32, (tile_m, _LANES), 0)
    col = jax.lax.broadcasted_iota(jnp.int32, (tile_m, _LANES), 1)
    idx = base + row * _LANES + col
    return jnp.where(idx < n_valid, fl, 0.0)


def _make_partials_kernel(tile_m, n_valid, need_mask, gamma, alpha):
    """Reduction path (megacore): one lane-dense (8,128) partial sum per block."""
    def kernel(pred_ref, true_ref, psum_ref):
        fl = _focal_elementwise(pred_ref[...], true_ref[...], gamma, alpha)
        fl = _apply_tail_mask(fl, tile_m, n_valid, need_mask)
        psum_ref[...] = _block_partial_sum(fl, tile_m)
    return kernel


def _make_resident_kernel(tile_m, n_valid, need_mask, gamma, alpha):
    """Reduction path (single TC): VMEM-resident (8,128) accumulator output."""
    def kernel(pred_ref, true_ref, out_ref):
        @pl.when(pl.program_id(0) == 0)
        def _():
            out_ref[...] = jnp.zeros_like(out_ref)
        fl = _focal_elementwise(pred_ref[...], true_ref[...], gamma, alpha)
        fl = _apply_tail_mask(fl, tile_m, n_valid, need_mask)
        out_ref[...] += _block_partial_sum(fl, tile_m)
    return kernel


def _make_none_kernel(gamma, alpha):
    """'none' path: dense elementwise focal loss, stored in the output dtype."""
    def kernel(pred_ref, true_ref, loss_ref):
        loss_ref[...] = _focal_elementwise(
            pred_ref[...], true_ref[...], gamma, alpha
        ).astype(loss_ref.dtype)
    return kernel


def _prefer_block_partials():
    """Per-block partials + 'parallel' grid let v7x megacore shard blocks across
    its 2 TensorCores; single-TC chips (v5e/v6e) do better with a resident VMEM
    accumulator (no partials HBM round trip, no second reduce launch)."""
    try:
        kind = jax.devices()[0].device_kind.lower()
    except Exception:
        return True
    return "v7" in kind


def focal_loss(pred, true, reduction="mean", gamma=GAMMA, alpha=ALPHA,
               max_tile_m=2048):
    """pred, true: arrays of identical shape (e.g. NCHW logits / targets)."""
    assert pred.shape == true.shape
    assert max_tile_m % _SUBLANE_GRAN == 0
    orig_shape = pred.shape
    n_elem = int(pred.size)

    # Flatten to (rows, 128) lanes; pad up to a whole number of large tiles and
    # mask the tail in-kernel, so the tile never degrades to tiny blocks.
    m_raw = -(-n_elem // _LANES)
    if m_raw <= max_tile_m:
        tile_m = _round_up(max(m_raw, _SUBLANE_GRAN), _SUBLANE_GRAN)
    else:
        tile_m = max_tile_m
    padded_m = _round_up(m_raw, tile_m)
    pad = padded_m * _LANES - n_elem

    pred_flat = pred.reshape(-1)
    true_flat = true.reshape(-1)
    if pad:
        pred_flat = jnp.pad(pred_flat, (0, pad))
        true_flat = jnp.pad(true_flat, (0, pad))
    pred2d = pred_flat.reshape(padded_m, _LANES)   # native dtype; f32 cast in-kernel
    true2d = true_flat.reshape(padded_m, _LANES)

    n_blocks = padded_m // tile_m
    need_mask = pad != 0

    in_specs = [
        pl.BlockSpec((tile_m, _LANES), lambda i: (i, 0)),
        pl.BlockSpec((tile_m, _LANES), lambda i: (i, 0)),
    ]
    # ~4 MiB working set at tile_m=2048 f32; 32 MiB cap keeps headroom on
    # v7x's 64 MiB/TC physical VMEM as well as v5e/v6e.
    vmem_cap = 32 * 1024 * 1024

    if reduction in ("mean", "sum"):
        if _prefer_block_partials():
            partials = pl.pallas_call(
                _make_partials_kernel(tile_m, n_elem, need_mask, gamma, alpha),
                out_shape=jax.ShapeDtypeStruct((n_blocks, 8, _LANES), jnp.float32),
                grid_spec=pltpu.PrefetchScalarGridSpec(
                    num_scalar_prefetch=0,
                    grid=(n_blocks,),
                    in_specs=in_specs,
                    out_specs=pl.BlockSpec((None, 8, _LANES), lambda i: (i, 0, 0)),
                ),
                compiler_params=pltpu.CompilerParams(
                    dimension_semantics=("parallel",),
                    vmem_limit_bytes=vmem_cap,
                ),
            )(pred2d, true2d)
            total = jnp.sum(partials, dtype=jnp.float32)
        else:
            acc = pl.pallas_call(
                _make_resident_kernel(tile_m, n_elem, need_mask, gamma, alpha),
                out_shape=jax.ShapeDtypeStruct((8, _LANES), jnp.float32),
                grid_spec=pltpu.PrefetchScalarGridSpec(
                    num_scalar_prefetch=0,
                    grid=(n_blocks,),
                    in_specs=in_specs,
                    out_specs=pl.BlockSpec((8, _LANES), lambda i: (0, 0)),
                ),
                compiler_params=pltpu.CompilerParams(
                    dimension_semantics=("arbitrary",),
                    vmem_limit_bytes=vmem_cap,
                ),
            )(pred2d, true2d)
            total = jnp.sum(acc, dtype=jnp.float32)
        return total / n_elem if reduction == "mean" else total

    # reduction == 'none': write back in pred.dtype (f32 math stays in-kernel);
    # padded rows produce garbage that is sliced off below (no mask needed).
    loss2d = pl.pallas_call(
        _make_none_kernel(gamma, alpha),
        out_shape=jax.ShapeDtypeStruct((padded_m, _LANES), pred.dtype),
        grid_spec=pltpu.PrefetchScalarGridSpec(
            num_scalar_prefetch=0,
            grid=(n_blocks,),
            in_specs=in_specs,
            out_specs=pl.BlockSpec((tile_m, _LANES), lambda i: (i, 0)),
        ),
        compiler_params=pltpu.CompilerParams(
            dimension_semantics=("parallel",),
            vmem_limit_bytes=vmem_cap,
        ),
    )(pred2d, true2d)
    return loss2d.reshape(-1)[:n_elem].reshape(orig_shape)


def _focal_ref(pred, true, reduction="mean", gamma=GAMMA, alpha=ALPHA):
    """Pure-JAX reference mirroring the PyTorch FocalLoss(BCEWithLogitsLoss)."""
    x = pred.astype(jnp.float32)
    z = true.astype(jnp.float32)
    bce = jnp.maximum(x, 0.0) - x * z + jnp.log1p(jnp.exp(-jnp.abs(x)))
    p = jax.nn.sigmoid(x)
    p_t = z * p + (1.0 - z) * (1.0 - p)
    af = z * alpha + (1.0 - z) * (1.0 - alpha)
    mf = (1.0 - p_t) ** gamma
    loss = bce * af * mf
    if reduction == "mean":
        return loss.mean()
    if reduction == "sum":
        return loss.sum()
    return loss


if __name__ == "__main__":
    key = jax.random.PRNGKey(0)
    k1, k2, k3, k4 = jax.random.split(key, 4)

    # Small NCHW logits/targets, consistent with a YOLO objectness head.
    shape = (2, 4, 16, 16)  # 2048 elements -> 16 rows of 128 (exercises tail mask)
    pred = jax.random.normal(k1, shape, dtype=jnp.float32)
    true = (jax.random.uniform(k2, shape) > 0.8).astype(jnp.float32)

    out_mean = jax.block_until_ready(focal_loss(pred, true, reduction="mean"))
    out_sum = jax.block_until_ready(focal_loss(pred, true, reduction="sum"))
    out_none = jax.block_until_ready(focal_loss(pred, true, reduction="none"))

    assert jnp.allclose(out_mean, _focal_ref(pred, true, "mean"), rtol=1e-4, atol=1e-6)
    assert jnp.allclose(out_sum, _focal_ref(pred, true, "sum"), rtol=1e-4, atol=1e-5)
    assert out_none.shape == shape and out_none.dtype == pred.dtype
    assert jnp.allclose(out_none, _focal_ref(pred, true, "none"), rtol=1e-4, atol=1e-6)

    # Awkward flattened size (1155 elements): padded + masked tail path.
    shape2 = (3, 5, 7, 11)
    pred2 = jax.random.normal(k3, shape2, dtype=jnp.float32)
    true2 = (jax.random.uniform(k4, shape2) > 0.8).astype(jnp.float32)
    out2 = jax.block_until_ready(focal_loss(pred2, true2, reduction="mean"))
    assert jnp.allclose(out2, _focal_ref(pred2, true2, "mean"), rtol=1e-4, atol=1e-6)

    # bf16 inputs: f32 math in-kernel; 'none' output stays bf16.
    pred_bf = pred.astype(jnp.bfloat16)
    true_bf = true.astype(jnp.bfloat16)
    out_bf_mean = jax.block_until_ready(focal_loss(pred_bf, true_bf, reduction="mean"))
    assert jnp.allclose(out_bf_mean, _focal_ref(pred_bf, true_bf, "mean"),
                        rtol=1e-3, atol=1e-5)
    out_bf_none = jax.block_until_ready(focal_loss(pred_bf, true_bf, reduction="none"))
    assert out_bf_none.dtype == jnp.bfloat16

    print("KERNEL_OK")
</pallas_src>

<mosaic_0001>
module attributes {stable_mosaic.version = 11 : i64} {
  func.func @kernel(%arg0: i32, %arg1: memref<32x128xf32, #tpu.memory_space<vmem>>, %arg2: memref<32x128xf32, #tpu.memory_space<vmem>>, %arg3: memref<8x128xf32, #tpu.memory_space<vmem>>) attributes {dimension_semantics = [#tpu.dimension_semantics<arbitrary>], iteration_bounds = array<i64: 1>, scalar_prefetch = 0 : i64, scratch_operands = 0 : i64, tpu.core_type = #tpu.core_type<tc>, window_params = [{transform_indices = @transform_0, window_bounds = array<i64: 32, 128>}, {transform_indices = @transform_1, window_bounds = array<i64: 32, 128>}, {pipeline_mode = #tpu.pipeline_mode<synchronous>, transform_indices = @transform_2, window_bounds = array<i64: 8, 128>}]} {
    %c0_i32 = arith.constant 0 : i32
    %0 = arith.cmpi eq, %arg0, %c0_i32 : i32
    %1 = arith.extui %0 : i1 to i32
    %c0_i32_0 = arith.constant 0 : i32
    %2 = arith.cmpi ne, %1, %c0_i32_0 : i32
    scf.if %2 {
      %cst_20 = arith.constant 0.000000e+00 : f32
      %74 = vector.broadcast %cst_20 : f32 to vector<8x128xf32>
      %c0_21 = arith.constant 0 : index
      %c0_22 = arith.constant 0 : index
      %75 = vector.load %arg3[%c0_21, %c0_22] : memref<8x128xf32, #tpu.memory_space<vmem>>, vector<8x128xf32>
      tpu.vector_store %arg3[%c0_21, %c0_22], %74 {strides = array<i32>} : memref<8x128xf32, #tpu.memory_space<vmem>>, vector<8x128xf32>,
    } else {
    }
    %c0 = arith.constant 0 : index
    %c0_1 = arith.constant 0 : index
    %3 = vector.load %arg1[%c0, %c0_1] : memref<32x128xf32, #tpu.memory_space<vmem>>, vector<32x128xf32>
    %c0_2 = arith.constant 0 : index
    %c0_3 = arith.constant 0 : index
    %4 = vector.load %arg2[%c0_2, %c0_3] : memref<32x128xf32, #tpu.memory_space<vmem>>, vector<32x128xf32>
    %5 = math.absf %3 : vector<32x128xf32>
    %cst = arith.constant 0.000000e+00 : f32
    %6 = vector.broadcast %cst : f32 to vector<32x128xf32>
    %7 = arith.subf %6, %5 : vector<32x128xf32>
    %8 = math.exp %7 : vector<32x128xf32>
    %cst_4 = arith.constant 0.000000e+00 : f32
    %9 = vector.broadcast %cst_4 : f32 to vector<32x128xf32>
    %10 = arith.maximumf %3, %9 : vector<32x128xf32>
    %11 = arith.mulf %3, %4 : vector<32x128xf32>
    %12 = arith.subf %10, %11 : vector<32x128xf32>
    %13 = math.log1p %8 : vector<32x128xf32>
    %14 = arith.addf %12, %13 : vector<32x128xf32>
    %cst_5 = arith.constant 1.000000e+00 : f32
    %15 = vector.broadcast %cst_5 : f32 to vector<32x128xf32>
    %16 = arith.addf %15, %8 : vector<32x128xf32>
    %17 = tpu.reciprocal %16 {approx = true} : vector<32x128xf32> -> vector<32x128xf32>
    %18 = arith.mulf %16, %17 : vector<32x128xf32>
    %cst_6 = arith.constant 2.000000e+00 : f32
    %19 = vector.broadcast %cst_6 : f32 to vector<32x128xf32>
    %20 = arith.subf %19, %18 : vector<32x128xf32>
    %21 = arith.mulf %17, %20 : vector<32x128xf32>
    %cst_7 = arith.constant 0.000000e+00 : f32
    %22 = vector.broadcast %cst_7 : f32 to vector<32x128xf32>
    %23 = arith.cmpf oge, %3, %22 : vector<32x128xf32>
    %24 = arith.mulf %8, %21 : vector<32x128xf32>
    %25 = arith.select %23, %21, %24 : vector<32x128xi1>, vector<32x128xf32>
    %26 = arith.mulf %4, %25 : vector<32x128xf32>
    %cst_8 = arith.constant 1.000000e+00 : f32
    %27 = vector.broadcast %cst_8 : f32 to vector<32x128xf32>
    %28 = arith.subf %27, %4 : vector<32x128xf32>
    %cst_9 = arith.constant 1.000000e+00 : f32
    %29 = vector.broadcast %cst_9 : f32 to vector<32x128xf32>
    %30 = arith.subf %29, %25 : vector<32x128xf32>
    %31 = arith.mulf %28, %30 : vector<32x128xf32>
    %32 = arith.addf %26, %31 : vector<32x128xf32>
    %cst_10 = arith.constant 2.500000e-01 : f32
    %33 = vector.broadcast %cst_10 : f32 to vector<32x128xf32>
    %34 = arith.mulf %4, %33 : vector<32x128xf32>
    %cst_11 = arith.constant 1.000000e+00 : f32
    %35 = vector.broadcast %cst_11 : f32 to vector<32x128xf32>
    %36 = arith.subf %35, %4 : vector<32x128xf32>
    %cst_12 = arith.constant 7.500000e-01 : f32
    %37 = vector.broadcast %cst_12 : f32 to vector<32x128xf32>
    %38 = arith.mulf %36, %37 : vector<32x128xf32>
    %39 = arith.addf %34, %38 : vector<32x128xf32>
    %cst_13 = arith.constant 1.000000e+00 : f32
    %40 = vector.broadcast %cst_13 : f32 to vector<32x128xf32>
    %41 = arith.subf %40, %32 : vector<32x128xf32>
    %42 = math.sqrt %41 : vector<32x128xf32>
    %43 = arith.mulf %41, %42 : vector<32x128xf32>
    %44 = arith.mulf %14, %39 : vector<32x128xf32>
    %45 = arith.mulf %44, %43 : vector<32x128xf32>
    %c4096_i32 = arith.constant 4096 : i32
    %46 = arith.muli %arg0, %c4096_i32 : i32
    %47 = tpu.iota {dimensions = array<i32: 0>} : vector<32x128xi32>
    %48 = tpu.iota {dimensions = array<i32: 1>} : vector<32x128xi32>
    %c128_i32 = arith.constant 128 : i32
    %49 = vector.broadcast %c128_i32 : i32 to vector<32x128xi32>
    %50 = arith.muli %47, %49 : vector<32x128xi32>
    %51 = vector.broadcast %46 : i32 to vector<32x128xi32>
    %52 = arith.addi %51, %50 : vector<32x128xi32>
    %53 = arith.addi %52, %48 : vector<32x128xi32>
    %c2048_i32 = arith.constant 2048 : i32
    %54 = vector.broadcast %c2048_i32 : i32 to vector<32x128xi32>
    %55 = arith.cmpi slt, %53, %54 : vector<32x128xi32>
    %cst_14 = arith.constant 0.000000e+00 : f32
    %56 = vector.broadcast %cst_14 : f32 to vector<32x128xf32>
    %57 = arith.select %55, %45, %56 : vector<32x128xi1>, vector<32x128xf32>
    %c0_15 = arith.constant 0 : index
    %c0_16 = arith.constant 0 : index
    %58 = vector.load %arg3[%c0_15, %c0_16] : memref<8x128xf32, #tpu.memory_space<vmem>>, vector<8x128xf32>
    %59 = vector.shape_cast %57 : vector<32x128xf32> to vector<4x1x8x128xf32>
    %cst_17 = arith.constant dense<0.000000e+00> : vector<4x8x128xf32>
    %60 = vector.multi_reduction <add>, %59, %cst_17 [1] : vector<4x1x8x128xf32> to vector<4x8x128xf32>
    %61 = vector.extract_strided_slice %60 {offsets = [0, 0, 0], sizes = [1, 8, 128], strides = [1, 1, 1]} : vector<4x8x128xf32> to vector<1x8x128xf32>
    %62 = vector.shape_cast %61 : vector<1x8x128xf32> to vector<8x128xf32>
    %63 = vector.extract_strided_slice %60 {offsets = [1, 0, 0], sizes = [1, 8, 128], strides = [1, 1, 1]} : vector<4x8x128xf32> to vector<1x8x128xf32>
    %64 = vector.shape_cast %63 : vector<1x8x128xf32> to vector<8x128xf32>
    %65 = arith.addf %62, %64 : vector<8x128xf32>
    %66 = vector.extract_strided_slice %60 {offsets = [2, 0, 0], sizes = [1, 8, 128], strides = [1, 1, 1]} : vector<4x8x128xf32> to vector<1x8x128xf32>
    %67 = vector.shape_cast %66 : vector<1x8x128xf32> to vector<8x128xf32>
    %68 = vector.extract_strided_slice %60 {offsets = [3, 0, 0], sizes = [1, 8, 128], strides = [1, 1, 1]} : vector<4x8x128xf32> to vector<1x8x128xf32>
    %69 = vector.shape_cast %68 : vector<1x8x128xf32> to vector<8x128xf32>
    %70 = arith.addf %67, %69 : vector<8x128xf32>
    %71 = arith.addf %65, %70 : vector<8x128xf32>
    %72 = arith.addf %58, %71 : vector<8x128xf32>
    %c0_18 = arith.constant 0 : index
    %c0_19 = arith.constant 0 : index
    %73 = vector.load %arg3[%c0_18, %c0_19] : memref<8x128xf32, #tpu.memory_space<vmem>>, vector<8x128xf32>
    tpu.vector_store %arg3[%c0_18, %c0_19], %72 {strides = array<i32>} : memref<8x128xf32, #tpu.memory_space<vmem>>, vector<8x128xf32>,
    return
  }
  func.func @transform_0(%arg0: i32) -> (i32, i32) {
    %c0_i32 = arith.constant 0 : i32
    %c0_i32_0 = arith.constant 0 : i32
    return %arg0, %c0_i32 : i32, i32
  }
  func.func @transform_1(%arg0: i32) -> (i32, i32) {
    %c0_i32 = arith.constant 0 : i32
    %c0_i32_0 = arith.constant 0 : i32
    return %arg0, %c0_i32 : i32, i32
  }
  func.func @transform_2(%arg0: i32) -> (i32, i32) {
    %c0_i32 = arith.constant 0 : i32
    %c0_i32_0 = arith.constant 0 : i32
    %c0_i32_1 = arith.constant 0 : i32
    return %c0_i32, %c0_i32_0 : i32, i32
  }
}

</mosaic_0001>

<llo_original>
// kernel: tpu_custom_call.1
$region0: #{tpu_custom_call.1}
  #allocation0 [shape = 'u32[]', space=smem, size = 0x4, offset = 0x4, fixed_abs, tag = 'smem constant byte address 0x4 - core index']
  #allocation1 [shape = 'u32[144,128]{1,0:T(1,128)}', space=vmem, size = 0x12000, scoped, tag = 'internal scratch']
  %s0 = inlined_call_operand.hbm [shape: f32[32,128], index: 0, kind: input, shape index: {}]
  %s1 = inlined_call_operand.hbm [shape: f32[32,128], index: 1, kind: input, shape index: {}]
  %s2 = inlined_call_operand.hbm [shape: f32[8,128], index: 2, kind: output, shape index: {}]
  %s3 = sld [smem:[#allocation0]]
  $region30: #{tpu_custom_call.1} parent=0
    _
  %s5 = ssub.s32 1, %s3
  %s6 = scalar_select 0, %s5, %s3
  $region1: #{tpu_custom_call.1} parent=0
    #allocation2 [shape = 'u8[16384]{0}', space=vmem, size = 0x4000, scoped, tag = 'input window, operand 0, single buffered']
    #allocation3 [shape = 's32[1]{0}', space=sflag, size = 0x4, scoped, tag = 'scoped memory for tpu_custom_call.1']
    #allocation4 [shape = 's32[1]{0}', space=sflag, size = 0x4, scoped, tag = 'scoped memory for tpu_custom_call.1']
    #allocation5 [shape = 'u8[16384]{0}', space=vmem, size = 0x4000, scoped, tag = 'input window, operand 1, single buffered']
    #allocation6 [shape = 's32[1]{0}', space=sflag, size = 0x4, scoped, tag = 'scoped memory for tpu_custom_call.1']
    #allocation7 [shape = 'u8[4096]{0}', space=vmem, size = 0x1000, scoped, tag = 'output window, operand 0, single buffered']
    %7 = vsyncpa [#allocation3], 0
    %8 = vsyncpa [#allocation6], 0
    %9 = vsyncpa [#allocation4], 0
    // Predicated region
    $region2: #{tpu_custom_call.1} parent=1 // pred_check
      _
    $region3: #{tpu_custom_call.1} parent=1 // pred_check_branch
      %11 = sbr.rel (0) target = $region5
    $region4: #{tpu_custom_call.1} parent=1 // pred_region
      %s13 = ssub.s32 512, 512
      %14 = vsyncadd [#allocation3], %s13
      %s15 = sshll.u32 [#allocation2], 4
      %s16 = int_to_ptr.vmem [resolvable:$true] %s15
      %21 = dma.hbm_to_vmem [thread:$0]  %s0, 512, %s16, [#allocation3], 128, 128, 8
    $region5: #{tpu_custom_call.1} parent=1 // pred_fallthru
      _
    // Predicated region
    $region6: #{tpu_custom_call.1} parent=1 // pred_check
      _
    $region7: #{tpu_custom_call.1} parent=1 // pred_check_branch
      %23 = sbr.rel (0) target = $region9
    $region8: #{tpu_custom_call.1} parent=1 // pred_region
      %s25 = ssub.s32 512, 512
      %26 = vsyncadd [#allocation6], %s25
      %s27 = sshll.u32 [#allocation5], 4
      %s28 = int_to_ptr.vmem [resolvable:$true] %s27
      %33 = dma.hbm_to_vmem [thread:$0]  %s1, 512, %s28, [#allocation6], 128, 128, 8
    $region9: #{tpu_custom_call.1} parent=1 // pred_fallthru
      _
    // Predicated region
    $region10: #{tpu_custom_call.1} parent=1 // pred_check
      _
    $region11: #{tpu_custom_call.1} parent=1 // pred_check_branch
      %35 = sbr.rel (0) target = $region13
    $region12: #{tpu_custom_call.1} parent=1 // pred_region
      %36 = dma.done [#allocation3], 512
    $region13: #{tpu_custom_call.1} parent=1 // pred_fallthru
      _
    // Predicated region
    $region14: #{tpu_custom_call.1} parent=1 // pred_check
      _
    $region15: #{tpu_custom_call.1} parent=1 // pred_check_branch
      %38 = sbr.rel (0) target = $region17
    $region16: #{tpu_custom_call.1} parent=1 // pred_region
      %39 = dma.done [#allocation6], 512
    $region17: #{tpu_custom_call.1} parent=1 // pred_fallthru
      _
    %p40 = scmp.eq.s32.totalorder 0, 0
    // Predicated region
    $region18: #{tpu_custom_call.1} parent=1 // pred_check
      %p41 = pneg %p40
    $region19: #{tpu_custom_call.1} parent=1 // pred_check_branch
      %43 = sbr.rel (%p41) target = $region21
    $region20: #{tpu_custom_call.1} parent=1 // pred_region
      %44 = vst [vmem:[#allocation7] sm:$0xff] 0.0
    $region21: #{tpu_custom_call.1} parent=1 // pred_fallthru
      _
    %v45 = vld [vmem:[#allocation2] sm:$0xff]
    %v46 = vld [vmem:[#allocation2 + $0x8] sm:$0xff]
    %v47 = vld [vmem:[#allocation2 + $0x10] sm:$0xff]
    %v48 = vld [vmem:[#allocation2 + $0x18] sm:$0xff]
    %v49 = vld [vmem:[#allocation5] sm:$0xff]
    %v50 = vld [vmem:[#allocation5 + $0x8] sm:$0xff]
    %v51 = vld [vmem:[#allocation5 + $0x10] sm:$0xff]
    %v52 = vld [vmem:[#allocation5 + $0x18] sm:$0xff]
    %v53 = vand.u32 2147483647, %v45
    %v54 = vand.u32 2147483647, %v46
    %v55 = vand.u32 2147483647, %v47
    %v56 = vand.u32 2147483647, %v48
    %v57 = vsub.f32 0.0, %v53
    %v58 = vsub.f32 0.0, %v54
    %v59 = vsub.f32 0.0, %v55
    %v60 = vsub.f32 0.0, %v56
    %v61 = vmul.f32 %v57, 1.442695
    %v62 = vpow.pop %v61
    %v63 = vmul.f32 %v58, 1.442695
    %v64 = vpow.pop %v63
    %v65 = vmul.f32 %v59, 1.442695
    %v66 = vpow.pop %v65
    %v67 = vmul.f32 %v60, 1.442695
    %v68 = vpow.pop %v67
    %v69 = vmax.f32 %v45, 0.0
    %v70 = vmax.f32 %v46, 0.0
    %v71 = vmax.f32 %v47, 0.0
    %v72 = vmax.f32 %v48, 0.0
    %v73 = vmul.f32 %v45, %v49
    %v74 = vmul.f32 %v46, %v50
    %v75 = vmul.f32 %v47, %v51
    %v76 = vmul.f32 %v48, %v52
    %v77 = vsub.f32 %v69, %v73
    %v78 = vsub.f32 %v70, %v74
    %v79 = vsub.f32 %v71, %v75
    %v80 = vsub.f32 %v72, %v76
    %v81 = vadd.f32 %v62, 1.0
    %v82 = vlog2.pop %v81
    %v83 = vmul.f32 %v82, 0.6931472
    %v84 = vmul.f32 -0.5, %v62
    %v85 = vadd.f32 %v84, 1.0
    %v86 = vmul.f32 %v85, %v62
    %v87 = vand.u32 2147483647, %v62
    %vm88 = vcmp.lt.f32.partialorder %v87, 0.0004427343
    %v89 = vsel %vm88, %v86, %v83
    %v90 = vadd.f32 %v64, 1.0
    %v91 = vlog2.pop %v90
    %v92 = vmul.f32 %v91, 0.6931472
    %v93 = vmul.f32 -0.5, %v64
    %v94 = vadd.f32 %v93, 1.0
    %v95 = vmul.f32 %v94, %v64
    %v96 = vand.u32 2147483647, %v64
    %vm97 = vcmp.lt.f32.partialorder %v96, 0.0004427343
    %v98 = vsel %vm97, %v95, %v92
    %v99 = vadd.f32 %v66, 1.0
    %v100 = vlog2.pop %v99
    %v101 = vmul.f32 %v100, 0.6931472
    %v102 = vmul.f32 -0.5, %v66
    %v103 = vadd.f32 %v102, 1.0
    %v104 = vmul.f32 %v103, %v66
    %v105 = vand.u32 2147483647, %v66
    %vm106 = vcmp.lt.f32.partialorder %v105, 0.0004427343
    %v107 = vsel %vm106, %v104, %v101
    %v108 = vadd.f32 %v68, 1.0
    %v109 = vlog2.pop %v108
    %v110 = vmul.f32 %v109, 0.6931472
    %v111 = vmul.f32 -0.5, %v68
    %v112 = vadd.f32 %v111, 1.0
    %v113 = vmul.f32 %v112, %v68
    %v114 = vand.u32 2147483647, %v68
    %vm115 = vcmp.lt.f32.partialorder %v114, 0.0004427343
    %v116 = vsel %vm115, %v113, %v110
    %v117 = vadd.f32 %v77, %v89
    %v118 = vadd.f32 %v78, %v98
    %v119 = vadd.f32 %v79, %v107
    %v120 = vadd.f32 %v80, %v116
    %v121 = vadd.f32 %v62, 1.0
    %v122 = vadd.f32 %v64, 1.0
    %v123 = vadd.f32 %v66, 1.0
    %v124 = vadd.f32 %v68, 1.0
    %v125 = vrcp.pop %v121
    %v126 = vrcp.pop %v122
    %v127 = vrcp.pop %v123
    %v128 = vrcp.pop %v124
    %v129 = vmul.f32 %v121, %v125
    %v130 = vmul.f32 %v122, %v126
    %v131 = vmul.f32 %v123, %v127
    %v132 = vmul.f32 %v124, %v128
    %v133 = vsub.f32 2.0, %v129
    %v134 = vsub.f32 2.0, %v130
    %v135 = vsub.f32 2.0, %v131
    %v136 = vsub.f32 2.0, %v132
    %v137 = vmul.f32 %v125, %v133
    %v138 = vmul.f32 %v126, %v134
    %v139 = vmul.f32 %v127, %v135
    %v140 = vmul.f32 %v128, %v136
    %vm141 = vcmp.ge.f32.partialorder %v45, 0.0
    %vm142 = vcmp.ge.f32.partialorder %v46, 0.0
    %vm143 = vcmp.ge.f32.partialorder %v47, 0.0
    %vm144 = vcmp.ge.f32.partialorder %v48, 0.0
    %v145 = vmul.f32 %v62, %v137
    %v146 = vmul.f32 %v64, %v138
    %v147 = vmul.f32 %v66, %v139
    %v148 = vmul.f32 %v68, %v140
    %v149 = vsel %vm141, %v137, %v145
    %v150 = vsel %vm142, %v138, %v146
    %v151 = vsel %vm143, %v139, %v147
    %v152 = vsel %vm144, %v140, %v148
    %v153 = vmul.f32 %v49, %v149
    %v154 = vmul.f32 %v50, %v150
    %v155 = vmul.f32 %v51, %v151
    %v156 = vmul.f32 %v52, %v152
    %v157 = vsub.f32 1.0, %v49
    %v158 = vsub.f32 1.0, %v50
    %v159 = vsub.f32 1.0, %v51
    %v160 = vsub.f32 1.0, %v52
    %v161 = vsub.f32 1.0, %v149
    %v162 = vsub.f32 1.0, %v150
    %v163 = vsub.f32 1.0, %v151
    %v164 = vsub.f32 1.0, %v152
    %v165 = vmul.f32 %v157, %v161
    %v166 = vmul.f32 %v158, %v162
    %v167 = vmul.f32 %v159, %v163
    %v168 = vmul.f32 %v160, %v164
    %v169 = vadd.f32 %v153, %v165
    %v170 = vadd.f32 %v154, %v166
    %v171 = vadd.f32 %v155, %v167
    %v172 = vadd.f32 %v156, %v168
    %v173 = vmul.f32 %v49, 0.25
    %v174 = vmul.f32 %v50, 0.25
    %v175 = vmul.f32 %v51, 0.25
    %v176 = vmul.f32 %v52, 0.25
    %v177 = vmul.f32 %v157, 0.75
    %v178 = vmul.f32 %v158, 0.75
    %v179 = vmul.f32 %v159, 0.75
    %v180 = vmul.f32 %v160, 0.75
    %v181 = vadd.f32 %v173, %v177
    %v182 = vadd.f32 %v174, %v178
    %v183 = vadd.f32 %v175, %v179
    %v184 = vadd.f32 %v176, %v180
    %v185 = vsub.f32 1.0, %v169
    %v186 = vsub.f32 1.0, %v170
    %v187 = vsub.f32 1.0, %v171
    %v188 = vsub.f32 1.0, %v172
    %v189 = vrsqrt.pop %v185
    %v190 = vmul.f32 %v185, %v189
    %vm191 = vcmp.eq.f32.partialorder %v185, inf
    %v192 = vsel %vm191, %v185, %v190
    %vm193 = vcmp.eq.f32.partialorder %v185, 0.0
    %v194 = vand.u32 %v185, 2147483648
    %v195 = vsel %vm193, %v194, %v192
    %v196 = vrsqrt.pop %v186
    %v197 = vmul.f32 %v186, %v196
    %vm198 = vcmp.eq.f32.partialorder %v186, inf
    %v199 = vsel %vm198, %v186, %v197
    %vm200 = vcmp.eq.f32.partialorder %v186, 0.0
    %v201 = vand.u32 %v186, 2147483648
    %v202 = vsel %vm200, %v201, %v199
    %v203 = vrsqrt.pop %v187
    %v204 = vmul.f32 %v187, %v203
    %vm205 = vcmp.eq.f32.partialorder %v187, inf
    %v206 = vsel %vm205, %v187, %v204
    %vm207 = vcmp.eq.f32.partialorder %v187, 0.0
    %v208 = vand.u32 %v187, 2147483648
    %v209 = vsel %vm207, %v208, %v206
    %v210 = vrsqrt.pop %v188
    %v211 = vmul.f32 %v188, %v210
    %vm212 = vcmp.eq.f32.partialorder %v188, inf
    %v213 = vsel %vm212, %v188, %v211
    %vm214 = vcmp.eq.f32.partialorder %v188, 0.0
    %v215 = vand.u32 %v188, 2147483648
    %v216 = vsel %vm214, %v215, %v213
    %v217 = vmul.f32 %v185, %v195
    %v218 = vmul.f32 %v186, %v202
    %v219 = vmul.f32 %v187, %v209
    %v220 = vmul.f32 %v188, %v216
    %v221 = vmul.f32 %v117, %v181
    %v222 = vmul.f32 %v118, %v182
    %v223 = vmul.f32 %v119, %v183
    %v224 = vmul.f32 %v120, %v184
    %v225 = vmul.f32 %v221, %v217
    %v226 = vmul.f32 %v222, %v218
    %v227 = vmul.f32 %v223, %v219
    %v228 = vmul.f32 %v224, %v220
    %s229 = smul.u32 0, 4096
    %v230 = vlaneseq
    %v231 = vshrl.u32 %v230, 7
    %v232 = vadd.s32 %v231, 8
    %v233 = vadd.s32 %v231, 16
    %v234 = vadd.s32 %v231, 24
    %v235 = vlaneseq
    %v236 = vand.u32 %v235, 127
    %v237 = vmul.u32 %v231, 128
    %v238 = vmul.u32 %v232, 128
    %v239 = vmul.u32 %v233, 128
    %v240 = vmul.u32 %v234, 128
    %v241 = vstv %s229
    %v242 = vadd.s32 %v241, %v237
    %v243 = vadd.s32 %v241, %v238
    %v244 = vadd.s32 %v241, %v239
    %v245 = vadd.s32 %v241, %v240
    %v246 = vadd.s32 %v242, %v236
    %v247 = vadd.s32 %v243, %v236
    %v248 = vadd.s32 %v244, %v236
    %v249 = vadd.s32 %v245, %v236
    %vm250 = vcmp.lt.s32.totalorder %v246, 2048
    %vm251 = vcmp.lt.s32.totalorder %v247, 2048
    %vm252 = vcmp.lt.s32.totalorder %v248, 2048
    %vm253 = vcmp.lt.s32.totalorder %v249, 2048
    %v254 = vsel %vm250, %v225, 0.0
    %v255 = vsel %vm251, %v226, 0.0
    %v256 = vsel %vm252, %v227, 0.0
    %v257 = vsel %vm253, %v228, 0.0
    %v258 = vld [vmem:[#allocation7] sm:$0xff]
    %v259 = vadd.f32 %v254, 0.0
    %v260 = vadd.f32 %v255, 0.0
    %v261 = vadd.f32 %v256, 0.0
    %v262 = vadd.f32 %v257, 0.0
    %v263 = vadd.f32 %v259, %v260
    %v264 = vadd.f32 %v261, %v262
    %v265 = vadd.f32 %v263, %v264
    %v266 = vadd.f32 %v258, %v265
    %267 = vst [vmem:[#allocation7] sm:$0xff] %v266
    // Predicated region
    $region22: #{tpu_custom_call.1} parent=1 // pred_check
      _
    $region23: #{tpu_custom_call.1} parent=1 // pred_check_branch
      %269 = sbr.rel (0) target = $region25
    $region24: #{tpu_custom_call.1} parent=1 // pred_region
      %s271 = ssub.s32 128, 128
      %272 = vsyncadd [#allocation4], %s271
      %s274 = sshll.u32 [#allocation7], 4
      %s275 = int_to_ptr.vmem [resolvable:$true] %s274
      %277 = dma.vmem_to_hbm [thread:$0]  %s275, 128, %s2, [#allocation4]
    $region25: #{tpu_custom_call.1} parent=1 // pred_fallthru
      _
    // Predicated region
    $region26: #{tpu_custom_call.1} parent=1 // pred_check
      _
    $region27: #{tpu_custom_call.1} parent=1 // pred_check_branch
      %279 = sbr.rel (0) target = $region29
    $region28: #{tpu_custom_call.1} parent=1 // pred_region
      %280 = dma.done [#allocation4], 128
    $region29: #{tpu_custom_call.1} parent=1 // pred_fallthru
      _
    %281 = vsyncpa [#allocation3], 1
    %282 = vsyncpa [#allocation6], 1
    %283 = vsyncpa [#allocation4], 1

</llo_original>
